<compile_context>
chip_gen: v5e
topology: v5e:2x2
jax: 0.10.0
libtpu: 0.0.40
codegen_flags: <defaults>
</compile_context>

<pallas_src>
import functools

import jax
import jax.numpy as jnp
from jax.experimental import pallas as pl
from jax.experimental.pallas import tpu as pltpu


# ----------------------------------------------------------------------------- kernels

def _attn_body(src_ref, srcT_ref, x_ref, wc_ref, attn_ref, mxu_dtype):
    src = src_ref[0].astype(mxu_dtype)        # (L, idf)   tiny, resident per batch
    srcT = srcT_ref[0].astype(mxu_dtype)      # (idf, L)   tiny, resident per batch
    x = x_ref[0].astype(mxu_dtype)            # (idf, Tq)  lane-dense streamed tile

    # scores^T for this query tile: (L, Tq) = sourceT^T @ target_tile
    s = jnp.dot(src, x, preferred_element_type=jnp.float32)

    # softmax over L (sublane axis 0); every query pixel (lane column) is independent.
    m = jnp.max(s, axis=0, keepdims=True)
    e = jnp.exp(s - m)
    inv = pl.reciprocal(jnp.sum(e, axis=0, keepdims=True), approx=True)
    p = e * inv                                # (L, Tq)

    if attn_ref is not None:
        attn_ref[0] = p.astype(attn_ref.dtype)

    # weightedContext tile: (idf, Tq) = sourceT (idf, L) @ attn^T (L, Tq)
    wc = jnp.dot(srcT, p.astype(mxu_dtype), preferred_element_type=jnp.float32)
    wc_ref[0] = wc.astype(wc_ref.dtype)


def _kernel_with_attn(src_ref, srcT_ref, x_ref, wc_ref, attn_ref, *, mxu_dtype):
    _attn_body(src_ref, srcT_ref, x_ref, wc_ref, attn_ref, mxu_dtype)


def _kernel_no_attn(src_ref, srcT_ref, x_ref, wc_ref, *, mxu_dtype):
    _attn_body(src_ref, srcT_ref, x_ref, wc_ref, None, mxu_dtype)


# ----------------------------------------------------------------------------- helpers

def _round_up(x, m):
    return ((x + m - 1) // m) * m


def _vmem_capacity_bytes():
    try:
        return int(pltpu.get_tpu_info().vmem_capacity_bytes)
    except Exception:
        return 64 << 20      # conservative fallback (v7x per-TC VMEM)


# ----------------------------------------------------------------------------- wrapper

def global_attention(x, context, conv_weight, *, q_tile_target=8192,
                     return_attn=True, mxu_dtype=None):
    """
    x:           (B, idf, ih, iw) float32
    context:     (B, cdf, L)      float32
    conv_weight: (idf, cdf)       float32  (1x1 conv weight, bias=False)
    returns (weightedContext (B, idf, ih, iw), attn (B, L, ih, iw))
            or weightedContext only if return_attn=False.
    """
    B, idf, ih, iw = x.shape
    _, cdf, L = context.shape
    query_l = ih * iw
    if mxu_dtype is None:
        mxu_dtype = jnp.float32

    # Hoisted 1x1-conv projection (trivial FLOPs; keeps the kernel state-free so both
    # grid axes can be "parallel").  Both layouts precomputed so neither dot needs a
    # transposed-LHS contraction in the kernel.
    source_t = jnp.einsum('oc,bcl->bol', conv_weight, context)      # (B, idf, L)
    src = jnp.transpose(source_t, (0, 2, 1))                        # (B, L, idf)

    x_flat = x.reshape(B, idf, query_l)

    # ---- VMEM budget / tile selection ------------------------------------------------
    capacity = _vmem_capacity_bytes()
    cap = min(capacity * 5 // 8, 80 << 20)          # ~40 MiB on v7x, 80 MiB on v5e/v6e
    l_pad = _round_up(L, 8)
    # per query column: double-buffered (x + wc [+ attn]) tiles + f32 s/e/p temporaries
    out_rows = 2 * idf + (L if return_attn else 0)
    bytes_per_col = 4 * (2 * out_rows + 3 * l_pad)
    small_bytes = 4 * (2 * L * idf) * 2             # src + srcT per-batch blocks, 2x buffered
    budget = max(cap - small_bytes - (8 << 20), 128 * bytes_per_col)

    q128 = _round_up(query_l, 128)
    tq = min(q128, max(128, (q_tile_target // 128) * 128))
    max_tq = max(128, (budget // bytes_per_col) // 128 * 128)
    tq = min(tq, max_tq)

    n_q = _round_up(query_l, tq) // tq
    q_pad = n_q * tq
    if q_pad != query_l:
        x_flat = jnp.pad(x_flat, ((0, 0), (0, 0), (0, q_pad - query_l)))

    vmem_limit = int(min(max(bytes_per_col * tq + small_bytes + (8 << 20), 32 << 20), cap))

    # ---- pallas_call -------------------------------------------------------------------
    in_specs = [
        pl.BlockSpec((1, L, idf), lambda b, q: (b, 0, 0)),     # src   (L, idf), resident
        pl.BlockSpec((1, idf, L), lambda b, q: (b, 0, 0)),     # srcT  (idf, L), resident
        pl.BlockSpec((1, idf, tq), lambda b, q: (b, 0, q)),    # input, streamed q-tiles
    ]
    wc_spec = pl.BlockSpec((1, idf, tq), lambda b, q: (b, 0, q))

    if return_attn:
        kernel = functools.partial(_kernel_with_attn, mxu_dtype=mxu_dtype)
        out_shape = (jax.ShapeDtypeStruct((B, idf, q_pad), x.dtype),
                     jax.ShapeDtypeStruct((B, L, q_pad), x.dtype))
        out_specs = [wc_spec, pl.BlockSpec((1, L, tq), lambda b, q: (b, 0, q))]
    else:
        kernel = functools.partial(_kernel_no_attn, mxu_dtype=mxu_dtype)
        out_shape = jax.ShapeDtypeStruct((B, idf, q_pad), x.dtype)
        out_specs = wc_spec

    out = pl.pallas_call(
        kernel,
        out_shape=out_shape,
        grid_spec=pltpu.PrefetchScalarGridSpec(
            num_scalar_prefetch=0,
            grid=(B, n_q),
            in_specs=in_specs,
            out_specs=out_specs,
        ),
        compiler_params=pltpu.CompilerParams(
            dimension_semantics=("parallel", "parallel"),
            vmem_limit_bytes=vmem_limit),
    )(src, source_t, x_flat)

    if return_attn:
        wc_flat, attn_flat = out
        return (wc_flat[..., :query_l].reshape(B, idf, ih, iw),
                attn_flat[..., :query_l].reshape(B, L, ih, iw))
    return out[..., :query_l].reshape(B, idf, ih, iw)


# ----------------------------------------------------------------------------- reference

def global_attention_ref(x, context, conv_weight):
    """Pure-JAX reference of the PyTorch forward (no mask)."""
    B, idf, ih, iw = x.shape
    L = context.shape[2]
    query_l = ih * iw
    target = x.reshape(B, idf, query_l)                              # (B, idf, Q)
    source_t = jnp.einsum('oc,bcl->bol', conv_weight, context)       # (B, idf, L)
    attn = jnp.einsum('bcq,bcl->bql', target, source_t)              # (B, Q, L)
    attn = jax.nn.softmax(attn, axis=-1)                             # softmax over L
    attn_t = jnp.transpose(attn, (0, 2, 1))                          # (B, L, Q)
    wc = jnp.einsum('bcl,blq->bcq', source_t, attn_t)                # (B, idf, Q)
    return wc.reshape(B, idf, ih, iw), attn_t.reshape(B, L, ih, iw)


# ----------------------------------------------------------------------------- test

if __name__ == "__main__":
    B, idf, cdf, L = 2, 32, 16, 8
    ih = iw = 16                                     # queryL = 256

    key = jax.random.PRNGKey(0)
    kx, kc, kw = jax.random.split(key, 3)
    x = jax.random.normal(kx, (B, idf, ih, iw), dtype=jnp.float32)
    context = jax.random.normal(kc, (B, cdf, L), dtype=jnp.float32)
    bound = 1.0 / (cdf ** 0.5)                       # PyTorch conv default init scale
    conv_weight = jax.random.uniform(kw, (idf, cdf), jnp.float32, -bound, bound)

    wc_ref, attn_ref = global_attention_ref(x, context, conv_weight)

    # Tolerances: 5e-3 covers the EUP approximate-reciprocal softmax normalization.
    TOL = dict(atol=5e-3, rtol=5e-3)

    # Default path: full-Q tile, single q step per batch (grid = (B, 1)).
    wc, attn = global_attention(x, context, conv_weight)
    jax.block_until_ready((wc, attn))
    assert wc.shape == (B, idf, ih, iw) and attn.shape == (B, L, ih, iw)
    assert jnp.allclose(wc, wc_ref, **TOL), "weightedContext mismatch (full-Q)"
    assert jnp.allclose(attn, attn_ref, **TOL), "attn mismatch (full-Q)"

    # Multi-tile path (forces a 2x2 grid at this toy size).
    wc2, attn2 = global_attention(x, context, conv_weight, q_tile_target=128)
    jax.block_until_ready((wc2, attn2))
    assert jnp.allclose(wc2, wc_ref, **TOL), "weightedContext mismatch (tiled)"
    assert jnp.allclose(attn2, attn_ref, **TOL), "attn mismatch (tiled)"

    # weightedContext-only path (drops the attn writeback entirely).
    wc3 = global_attention(x, context, conv_weight, return_attn=False)
    jax.block_until_ready(wc3)
    assert jnp.allclose(wc3, wc_ref, **TOL), "weightedContext mismatch (no-attn)"

    # Odd (non-128-aligned) feature map: exercises the Q-padding path.
    ih2 = iw2 = 9                                    # queryL = 81 -> padded to 128
    x_odd = jax.random.normal(kx, (B, idf, ih2, iw2), dtype=jnp.float32)
    wc4, attn4 = global_attention(x_odd, context, conv_weight)
    jax.block_until_ready((wc4, attn4))
    wc4_ref, attn4_ref = global_attention_ref(x_odd, context, conv_weight)
    assert jnp.allclose(wc4, wc4_ref, **TOL), "weightedContext mismatch (odd Q)"
    assert jnp.allclose(attn4, attn4_ref, **TOL), "attn mismatch (odd Q)"

    print("KERNEL_OK")
</pallas_src>

<mosaic_0001>
module attributes {stable_mosaic.version = 11 : i64} {
  func.func @_kernel_with_attn(%arg0: i32, %arg1: i32, %arg2: memref<1x8x32xf32, #tpu.memory_space<vmem>>, %arg3: memref<1x32x8xf32, #tpu.memory_space<vmem>>, %arg4: memref<1x32x256xf32, #tpu.memory_space<vmem>>, %arg5: memref<1x32x256xf32, #tpu.memory_space<vmem>>, %arg6: memref<1x8x256xf32, #tpu.memory_space<vmem>>) attributes {dimension_semantics = [#tpu.dimension_semantics<parallel>, #tpu.dimension_semantics<parallel>], iteration_bounds = array<i64: 2, 1>, scalar_prefetch = 0 : i64, scratch_operands = 0 : i64, tpu.core_type = #tpu.core_type<tc>, window_params = [{transform_indices = @transform_0, window_bounds = array<i64: 1, 8, 32>}, {transform_indices = @transform_1, window_bounds = array<i64: 1, 32, 8>}, {transform_indices = @transform_2, window_bounds = array<i64: 1, 32, 256>}, {transform_indices = @transform_3, window_bounds = array<i64: 1, 32, 256>}, {transform_indices = @transform_4, window_bounds = array<i64: 1, 8, 256>}]} {
    %c0 = arith.constant 0 : index
    %c0_0 = arith.constant 0 : index
    %c0_1 = arith.constant 0 : index
    %0 = vector.load %arg2[%c0, %c0_0, %c0_1] : memref<1x8x32xf32, #tpu.memory_space<vmem>>, vector<1x8x32xf32>
    %1 = vector.shape_cast %0 : vector<1x8x32xf32> to vector<8x32xf32>
    %c0_2 = arith.constant 0 : index
    %c0_3 = arith.constant 0 : index
    %c0_4 = arith.constant 0 : index
    %2 = vector.load %arg3[%c0_2, %c0_3, %c0_4] : memref<1x32x8xf32, #tpu.memory_space<vmem>>, vector<1x32x8xf32>
    %3 = vector.shape_cast %2 : vector<1x32x8xf32> to vector<32x8xf32>
    %c0_5 = arith.constant 0 : index
    %c0_6 = arith.constant 0 : index
    %c0_7 = arith.constant 0 : index
    %4 = vector.load %arg4[%c0_5, %c0_6, %c0_7] : memref<1x32x256xf32, #tpu.memory_space<vmem>>, vector<1x32x256xf32>
    %5 = vector.shape_cast %4 : vector<1x32x256xf32> to vector<32x256xf32>
    %cst = arith.constant dense<0.000000e+00> : vector<8x256xf32>
    %6 = tpu.matmul %1, %5, %cst {dimension_numbers = #tpu.dot_dimension_numbers<[1], [0], [0], [1], [0, 0, 1, 1], [], []>} : vector<8x32xf32>, vector<32x256xf32>, vector<8x256xf32> -> vector<8x256xf32>
    %cst_8 = arith.constant dense<0xFF800000> : vector<256xf32>
    %7 = vector.multi_reduction <maximumf>, %6, %cst_8 [0] : vector<8x256xf32> to vector<256xf32>
    %8 = vector.shape_cast %7 : vector<256xf32> to vector<1x256xf32>
    %9 = vector.broadcast %8 : vector<1x256xf32> to vector<8x256xf32>
    %10 = arith.subf %6, %9 : vector<8x256xf32>
    %11 = math.exp %10 : vector<8x256xf32>
    %cst_9 = arith.constant dense<0.000000e+00> : vector<256xf32>
    %12 = vector.multi_reduction <add>, %11, %cst_9 [0] : vector<8x256xf32> to vector<256xf32>
    %13 = vector.shape_cast %12 : vector<256xf32> to vector<1x256xf32>
    %14 = tpu.reciprocal %13 {approx = true} : vector<1x256xf32> -> vector<1x256xf32>
    %15 = vector.broadcast %14 : vector<1x256xf32> to vector<8x256xf32>
    %16 = arith.mulf %11, %15 : vector<8x256xf32>
    %c0_10 = arith.constant 0 : index
    %c0_11 = arith.constant 0 : index
    %c0_12 = arith.constant 0 : index
    %17 = vector.load %arg6[%c0_10, %c0_11, %c0_12] : memref<1x8x256xf32, #tpu.memory_space<vmem>>, vector<1x8x256xf32>
    %18 = vector.shape_cast %17 : vector<1x8x256xf32> to vector<8x256xf32>
    %19 = vector.shape_cast %16 : vector<8x256xf32> to vector<1x8x256xf32>
    tpu.vector_store %arg6[%c0_10, %c0_11, %c0_12], %19 {strides = array<i32>} : memref<1x8x256xf32, #tpu.memory_space<vmem>>, vector<1x8x256xf32>,
    %cst_13 = arith.constant dense<0.000000e+00> : vector<32x256xf32>
    %20 = tpu.matmul %3, %16, %cst_13 {dimension_numbers = #tpu.dot_dimension_numbers<[1], [0], [0], [1], [0, 0, 1, 1], [], []>} : vector<32x8xf32>, vector<8x256xf32>, vector<32x256xf32> -> vector<32x256xf32>
    %c0_14 = arith.constant 0 : index
    %c0_15 = arith.constant 0 : index
    %c0_16 = arith.constant 0 : index
    %21 = vector.load %arg5[%c0_14, %c0_15, %c0_16] : memref<1x32x256xf32, #tpu.memory_space<vmem>>, vector<1x32x256xf32>
    %22 = vector.shape_cast %21 : vector<1x32x256xf32> to vector<32x256xf32>
    %23 = vector.shape_cast %20 : vector<32x256xf32> to vector<1x32x256xf32>
    tpu.vector_store %arg5[%c0_14, %c0_15, %c0_16], %23 {strides = array<i32>} : memref<1x32x256xf32, #tpu.memory_space<vmem>>, vector<1x32x256xf32>,
    return
  }
  func.func @transform_0(%arg0: i32, %arg1: i32) -> (i32, i32, i32) {
    %c0_i32 = arith.constant 0 : i32
    %c0_i32_0 = arith.constant 0 : i32
    %c0_i32_1 = arith.constant 0 : i32
    return %arg0, %c0_i32, %c0_i32_0 : i32, i32, i32
  }
  func.func @transform_1(%arg0: i32, %arg1: i32) -> (i32, i32, i32) {
    %c0_i32 = arith.constant 0 : i32
    %c0_i32_0 = arith.constant 0 : i32
    %c0_i32_1 = arith.constant 0 : i32
    return %arg0, %c0_i32, %c0_i32_0 : i32, i32, i32
  }
  func.func @transform_2(%arg0: i32, %arg1: i32) -> (i32, i32, i32) {
    %c0_i32 = arith.constant 0 : i32
    %c0_i32_0 = arith.constant 0 : i32
    return %arg0, %c0_i32, %arg1 : i32, i32, i32
  }
  func.func @transform_3(%arg0: i32, %arg1: i32) -> (i32, i32, i32) {
    %c0_i32 = arith.constant 0 : i32
    %c0_i32_0 = arith.constant 0 : i32
    return %arg0, %c0_i32, %arg1 : i32, i32, i32
  }
  func.func @transform_4(%arg0: i32, %arg1: i32) -> (i32, i32, i32) {
    %c0_i32 = arith.constant 0 : i32
    %c0_i32_0 = arith.constant 0 : i32
    return %arg0, %c0_i32, %arg1 : i32, i32, i32
  }
}

</mosaic_0001>

<llo_original>
// kernel: tpu_custom_call.1
$region0: #{tpu_custom_call.1}
  #allocation0 [shape = 'u32[]', space=smem, size = 0x4, offset = 0x4, fixed_abs, tag = 'smem constant byte address 0x4 - core index']
  #allocation1 [shape = 'u32[72,128]{1,0:T(1,128)}', space=vmem, size = 0x9000, scoped, tag = 'internal scratch']
  %s0 = inlined_call_operand.vmem [shape: f32[2,8,32], index: 0, kind: input, shape index: {}]
  %s1 = inlined_call_operand.vmem [shape: f32[2,32,8], index: 1, kind: input, shape index: {}]
  %s2 = inlined_call_operand.hbm [shape: f32[2,32,256], index: 2, kind: input, shape index: {}]
  %s3 = inlined_call_operand.hbm [shape: f32[2,32,256], index: 3, kind: output, shape index: {0}]
  %s4 = inlined_call_operand.hbm [shape: f32[2,8,256], index: 4, kind: output, shape index: {1}]
  %5 = xla_tuple %s3, %s4
  %s6 = sld [smem:[#allocation0]]
  $region57: #{tpu_custom_call.1} parent=0
    _
  %s8 = ssub.s32 1, %s6
  %s9 = scalar_select 0, %s8, %s6
  $region1: #{tpu_custom_call.1} parent=0
    #allocation2 [shape = 'u8[65536]{0}', space=vmem, size = 0x10000, scoped, tag = 'input window, operand 2']
    #allocation3 [shape = 's32[2]{0}', space=sflag, size = 0x8, scoped, tag = 'scoped memory for tpu_custom_call.1']
    #allocation4 [shape = 's32[2]{0}', space=sflag, size = 0x8, scoped, tag = 'scoped memory for tpu_custom_call.1']
    #allocation5 [shape = 'u8[65536]{0}', space=vmem, size = 0x10000, scoped, tag = 'output window, operand 0']
    #allocation6 [shape = 'u8[16384]{0}', space=vmem, size = 0x4000, scoped, tag = 'output window, operand 1']
    #allocation7 [shape = 's32[2]{0}', space=sflag, size = 0x8, scoped, tag = 'scoped memory for tpu_custom_call.1']
    %10 = vsyncpa [#allocation3], 0
    %s11 = scalar_lea.sflag [#allocation3], 1
    %12 = vsyncpa %s11, 0
    %13 = vsyncpa [#allocation4], 0
    %s14 = scalar_lea.sflag [#allocation4], 1
    %15 = vsyncpa %s14, 0
    %16 = vsyncpa [#allocation7], 0
    %s17 = scalar_lea.sflag [#allocation7], 1
    %18 = vsyncpa %s17, 0
    loop: start=0, step=1, limit=4
    $region2: #{tpu_custom_call.1} parent=1 // loop_pre_header
      _
    $region3: #{tpu_custom_call.1} parent=1 // loop_header
      %s20 = sphi 0, %s24
      %p21 = scmp.ge.s32.totalorder %s20, 4
      %s27 = sphi 0, %s39
      %s28 = sphi 0, %s35
      %s29 = sphi 0, %s27
      %s30 = sphi 0, %s28
      %s31 = sphi 0, %s29
      %s32 = sphi 0, %s30
      %s42 = sphi 0, %s44
      %s45 = sphi 0, %s42
      %s46 = sphi 0, %s45
      %s62 = sphi 0, %s46
      %s68 = sphi 0, %s70
      %s71 = sphi 0, %s68
      %s72 = sphi 0, %s71
      %s88 = sphi 0, %s72
      %s96 = sphi 0, %s98
      %s99 = sphi 0, %s96
      %s100 = sphi 0, %s99
      %s116 = sphi 0, %s100
      %s124 = sphi 0, %s126
      %s127 = sphi 0, %s124
      %s128 = sphi 0, %s127
      %s144 = sphi 0, %s128
      %s152 = sphi 0, %s154
      %s155 = sphi 0, %s152
      %s156 = sphi 0, %s155
      %s172 = sphi 0, %s156
    $region4: #{tpu_custom_call.1} parent=1 // loop_header_branch
      %23 = sbr.rel (%p21) target = $region8
    $region5: #{tpu_custom_call.1} parent=1 // loop_body
      %s25 = ssub.s32 %s20, 1
      %s26 = ssub.s32 %s20, 2
      %s33 = sadd.s32 1, %s28
      %p34 = scmp.ge.s32.totalorder %s33, 1
      %s35 = scalar_select %p34, 0, %s33
      %s36 = sadd.s32 1, %s27
      %s37 = scalar_select %p34, %s36, %s27
      %p38 = scmp.ge.s32.totalorder %s37, 2
      %s39 = scalar_select %p38, 0, %s37
      %s40 = ssub.s32 %s27, %s39
      %p41 = scmp.eq.s32.totalorder %s40, 0
      %s43 = sadd.s32 %s42, 1
      %s44 = scalar_select %p41, %s42, %s43
      %p47 = pneg %p41
      %p48 = scmp.eq.s32.totalorder %s20, 1
      %p49 = por %p47, %p48
      %p50 = scmp.ne.s32.totalorder %s42, %s45
      %p51 = scmp.eq.s32.totalorder %s20, 0
      %p52 = por %p50, %p51
      %p53 = scmp.ne.s32.totalorder %s42, %s45
      %p54 = scmp.eq.s32.totalorder %s25, 1
      %p55 = por %p53, %p54
      %p56 = scmp.ne.s32.totalorder %s45, %s46
      %p57 = scmp.eq.s32.totalorder %s25, 0
      %p58 = por %p56, %p57
      %p59 = scmp.ne.s32.totalorder %s45, %s46
      %p60 = scmp.eq.s32.totalorder %s26, 1
      %p61 = por %p59, %p60
      %p63 = scmp.ne.s32.totalorder %s46, %s62
      %p64 = scmp.eq.s32.totalorder %s26, 0
      %p65 = por %p63, %p64
      %s66 = ssub.s32 %s27, %s39
      %p67 = scmp.eq.s32.totalorder %s66, 0
      %s69 = sadd.s32 %s68, 1
      %s70 = scalar_select %p67, %s68, %s69
      %p73 = pneg %p67
      %p74 = scmp.eq.s32.totalorder %s20, 1
      %p75 = por %p73, %p74
      %p76 = scmp.ne.s32.totalorder %s68, %s71
      %p77 = scmp.eq.s32.totalorder %s20, 0
      %p78 = por %p76, %p77
      %p79 = scmp.ne.s32.totalorder %s68, %s71
      %p80 = scmp.eq.s32.totalorder %s25, 1
      %p81 = por %p79, %p80
      %p82 = scmp.ne.s32.totalorder %s71, %s72
      %p83 = scmp.eq.s32.totalorder %s25, 0
      %p84 = por %p82, %p83
      %p85 = scmp.ne.s32.totalorder %s71, %s72
      %p86 = scmp.eq.s32.totalorder %s26, 1
      %p87 = por %p85, %p86
      %p89 = scmp.ne.s32.totalorder %s72, %s88
      %p90 = scmp.eq.s32.totalorder %s26, 0
      %p91 = por %p89, %p90
      %s92 = ssub.s32 %s27, %s39
      %s93 = ssub.s32 %s28, %s35
      %s94 = sor.u32 %s92, %s93
      %p95 = scmp.eq.s32.totalorder %s94, 0
      %s97 = sadd.s32 %s96, 1
      %s98 = scalar_select %p95, %s96, %s97
      %p101 = pneg %p95
      %p102 = scmp.eq.s32.totalorder %s20, 1
      %p103 = por %p101, %p102
      %p104 = scmp.ne.s32.totalorder %s96, %s99
      %p105 = scmp.eq.s32.totalorder %s20, 0
      %p106 = por %p104, %p105
      %p107 = scmp.ne.s32.totalorder %s96, %s99
      %p108 = scmp.eq.s32.totalorder %s25, 1
      %p109 = por %p107, %p108
      %p110 = scmp.ne.s32.totalorder %s99, %s100
      %p111 = scmp.eq.s32.totalorder %s25, 0
      %p112 = por %p110, %p111
      %p113 = scmp.ne.s32.totalorder %s99, %s100
      %p114 = scmp.eq.s32.totalorder %s26, 1
      %p115 = por %p113, %p114
      %p117 = scmp.ne.s32.totalorder %s100, %s116
      %p118 = scmp.eq.s32.totalorder %s26, 0
      %p119 = por %p117, %p118
      %s120 = ssub.s32 %s27, %s39
      %s121 = ssub.s32 %s28, %s35
      %s122 = sor.u32 %s120, %s121
      %p123 = scmp.eq.s32.totalorder %s122, 0
      %s125 = sadd.s32 %s124, 1
      %s126 = scalar_select %p123, %s124, %s125
      %p129 = pneg %p123
      %p130 = scmp.eq.s32.totalorder %s20, 1
      %p131 = por %p129, %p130
      %p132 = scmp.ne.s32.totalorder %s124, %s127
      %p133 = scmp.eq.s32.totalorder %s20, 0
      %p134 = por %p132, %p133
      %p135 = scmp.ne.s32.totalorder %s124, %s127
      %p136 = scmp.eq.s32.totalorder %s25, 1
      %p137 = por %p135, %p136
      %p138 = scmp.ne.s32.totalorder %s127, %s128
      %p139 = scmp.eq.s32.totalorder %s25, 0
      %p140 = por %p138, %p139
      %p141 = scmp.ne.s32.totalorder %s127, %s128
      %p142 = scmp.eq.s32.totalorder %s26, 1
      %p143 = por %p141, %p142
      %p145 = scmp.ne.s32.totalorder %s128, %s144
      %p146 = scmp.eq.s32.totalorder %s26, 0
      %p147 = por %p145, %p146
      %s148 = ssub.s32 %s27, %s39
      %s149 = ssub.s32 %s28, %s35
      %s150 = sor.u32 %s148, %s149
      %p151 = scmp.eq.s32.totalorder %s150, 0
      %s153 = sadd.s32 %s152, 1
      %s154 = scalar_select %p151, %s152, %s153
      %p157 = pneg %p151
      %p158 = scmp.eq.s32.totalorder %s20, 1
      %p159 = por %p157, %p158
      %p160 = scmp.ne.s32.totalorder %s152, %s155
      %p161 = scmp.eq.s32.totalorder %s20, 0
      %p162 = por %p160, %p161
      %p163 = scmp.ne.s32.totalorder %s152, %s155
      %p164 = scmp.eq.s32.totalorder %s25, 1
      %p165 = por %p163, %p164
      %p166 = scmp.ne.s32.totalorder %s155, %s156
      %p167 = scmp.eq.s32.totalorder %s25, 0
      %p168 = por %p166, %p167
      %p169 = scmp.ne.s32.totalorder %s155, %s156
      %p170 = scmp.eq.s32.totalorder %s26, 1
      %p171 = por %p169, %p170
      %p173 = scmp.ne.s32.totalorder %s156, %s172
      %p174 = scmp.eq.s32.totalorder %s26, 0
      %p175 = por %p173, %p174
      %p176 = scmp.le.s32.totalorder 1, %s20
      %p177 = scmp.lt.s32.totalorder %s20, 3
      %p178 = pnand %p176, %p177
      %p179 = pneg %p178
      // Predicated region
      $region9: #{tpu_custom_call.1} parent=5 // pred_check
        _
      $region10: #{tpu_custom_call.1} parent=5 // pred_check_branch
        %181 = sbr.rel (%p178) target = $region12
      $region11: #{tpu_custom_call.1} parent=5 // pred_region
        %s182 = ssub.s32 %s20, 1
      $region12: #{tpu_custom_call.1} parent=5 // pred_fallthru
        _
      %p183 = scmp.lt.s32.totalorder %s20, 2
      // Predicated region
      $region13: #{tpu_custom_call.1} parent=5 // pred_check
        %p184 = pneg %p183
      $region14: #{tpu_custom_call.1} parent=5 // pred_check_branch
        %186 = sbr.rel (%p184) target = $region16
      $region15: #{tpu_custom_call.1} parent=5 // pred_region
        // Predicated region
        $region17: #{tpu_custom_call.1} parent=15 // pred_check
          %p187 = pneg %p52
        $region18: #{tpu_custom_call.1} parent=15 // pred_check_branch
          %189 = sbr.rel (%p187) target = $region20
        $region19: #{tpu_custom_call.1} parent=15 // pred_region
          %p190 = scmp.lt.s32.totalorder %s27, 1
          %s191 = scalar_select %p190, %s27, 1
          %s192 = smul.addr %s191, 8
          %s193 = scalar_lea.vmem %s0, %s192
        $region20: #{tpu_custom_call.1} parent=15 // pred_fallthru
          _
        // Predicated region
        $region21: #{tpu_custom_call.1} parent=15 // pred_check
          %p194 = pneg %p78
        $region22: #{tpu_custom_call.1} parent=15 // pred_check_branch
          %196 = sbr.rel (%p194) target = $region24
        $region23: #{tpu_custom_call.1} parent=15 // pred_region
          %p197 = scmp.lt.s32.totalorder %s27, 1
          %s198 = scalar_select %p197, %s27, 1
          %s199 = smul.addr %s198, 4
          %s200 = smul.addr %s199, 8
          %s201 = scalar_lea.vmem %s1, %s200
        $region24: #{tpu_custom_call.1} parent=15 // pred_fallthru
          _
        // Predicated region
        $region25: #{tpu_custom_call.1} parent=15 // pred_check
          %p202 = pneg %p106
        $region26: #{tpu_custom_call.1} parent=15 // pred_check_branch
          %204 = sbr.rel (%p202) target = $region28
        $region27: #{tpu_custom_call.1} parent=15 // pred_region
          %s205 = sand.u32 %s96, 1
          %s206 = scalar_lea.sflag [#allocation3], %s205
          %s207 = sand.u32 %s96, 1
          %s208 = smul.addr %s207, 64
          %s209 = scalar_lea.vmem [#allocation2], %s208
          %s210 = smul.u32 2, %s28
          %212 = vsyncadd %s206, 0
          %s213 = smul.addr %s27, 8
          %s214 = sadd.s32 %s210, %s213
          %s215 = smul.addr %s214, 8
          %s216 = scalar_lea.hbm %s2, %s215
          %s217 = sshll.u32 %s216, 4
          %s218 = int_to_ptr.hbm [resolvable:$true] %s217
          %s219 = sshll.u32 %s209, 4
          %s220 = int_to_ptr.vmem [resolvable:$true] %s219
          %225 = dma.hbm_to_vmem [thread:$0]  %s218, 1024, %s220, %s206, 256, 256, 16
        $region28: #{tpu_custom_call.1} parent=15 // pred_fallthru
          _
      $region16: #{tpu_custom_call.1} parent=5 // pred_fallthru
        _
      %p226 = scmp.le.s32.totalorder 1, %s20
      %p227 = scmp.lt.s32.totalorder %s20, 3
      %p228 = pnand %p226, %p227
      %p229 = pneg %p228
      // Predicated region
      $region29: #{tpu_custom_call.1} parent=5 // pred_check
        _
      $region30: #{tpu_custom_call.1} parent=5 // pred_check_branch
        %231 = sbr.rel (%p228) target = $region32
      $region31: #{tpu_custom_call.1} parent=5 // pred_region
        %s232 = ssub.s32 %s20, 1
        %s233 = sand.u32 %s99, 1
        %s234 = scalar_lea.sflag [#allocation3], %s233
        %s235 = sand.u32 %s99, 1
        %s236 = smul.addr %s235, 64
        %s237 = scalar_lea.vmem [#allocation2], %s236
        // Predicated region
        $region33: #{tpu_custom_call.1} parent=31 // pred_check
          %p238 = pneg %p112
        $region34: #{tpu_custom_call.1} parent=31 // pred_check_branch
          %240 = sbr.rel (%p238) target = $region36
        $region35: #{tpu_custom_call.1} parent=31 // pred_region
          %242 = dma.done %s234, 1024
        $region36: #{tpu_custom_call.1} parent=31 // pred_fallthru
          _
        %p243 = scmp.lt.s32.totalorder %s29, 1
        %s244 = scalar_select %p243, %s29, 1
        %s245 = smul.addr %s244, 8
        %s246 = scalar_lea.vmem %s0, %s245
        %p247 = pneg %p58
        %p248 = pneg %p55
        %p249 = scmp.lt.s32.totalorder %s29, 1
        %s250 = scalar_select %p249, %s29, 1
        %s251 = smul.addr %s250, 4
        %s252 = smul.addr %s251, 8
        %s253 = scalar_lea.vmem %s1, %s252
        %p254 = pneg %p84
        %p255 = pneg %p81
        %s256 = sand.u32 %s99, 1
        %s257 = scalar_lea.sflag [#allocation3], %s256
        %s258 = sand.u32 %s99, 1
        %s259 = smul.addr %s258, 64
        %s260 = scalar_lea.vmem [#allocation2], %s259
        %p261 = pneg %p112
        %p262 = pneg %p109
        %p263 = pneg %p140
        %p264 = pneg %p137
        %s265 = sand.u32 %s127, 1
        %s266 = scalar_lea.sflag [#allocation4], %s265
        %s267 = sand.u32 %s127, 1
        %s268 = smul.addr %s267, 64
        %s269 = scalar_lea.vmem [#allocation5], %s268
        %p270 = pneg %p168
        %p271 = pneg %p165
        %s272 = sand.u32 %s155, 1
        %s273 = scalar_lea.sflag [#allocation7], %s272
        %s274 = sand.u32 %s155, 1
        %s275 = smul.addr %s274, 16
        %s276 = scalar_lea.vmem [#allocation6], %s275
        %p277 = scmp.lt.s32.totalorder %s29, 1
        %s278 = scalar_select %p277, %s29, 1
        %s279 = smul.addr %s278, 8
        %s280 = scalar_lea.vmem %s0, %s279
        %p281 = scmp.lt.s32.totalorder %s29, 1
        %s282 = scalar_select %p281, %s29, 1
        %s283 = smul.addr %s282, 4
        %s284 = smul.addr %s283, 8
        %s285 = scalar_lea.vmem %s1, %s284
        %s286 = smul.u32 2, %s30
        %s287 = smul.u32 2, %s30
        %s288 = smul.u32 2, %s30
        %v289 = vld [vmem:[%s280] sm:$0xff]
        %v290 = vld [vmem:[%s285] sm:$0xff]
        %v291 = vld [vmem:[%s285 + $0x8] sm:$0xff]
        %v292 = vld [vmem:[%s285 + $0x10] sm:$0xff]
        %v293 = vld [vmem:[%s285 + $0x18] sm:$0xff]
        %v294 = vld [vmem:[%s237] sm:$0xff]
        %v295 = vld [vmem:[%s237 + $0x8] sm:$0xff]
        %v296 = vld [vmem:[%s237 + $0x10] sm:$0xff]
        %v297 = vld [vmem:[%s237 + $0x18] sm:$0xff]
        %v298 = vld [vmem:[%s237 + $0x20] sm:$0xff]
        %v299 = vld [vmem:[%s237 + $0x28] sm:$0xff]
        %v300 = vld [vmem:[%s237 + $0x30] sm:$0xff]
        %v301 = vld [vmem:[%s237 + $0x38] sm:$0xff]
        %vm302 = vcmask 261120
        %v304 = vsel %vm302, %v289, 0
        %306 = vmatpush.msra.mxu0 0.0
        %307 = vmatpush.msra.mxu0 0.0
        %308 = vmatpush.msra.mxu0 0.0
        %309 = vmatpush.msra.mxu0 0.0
        %310 = vmatpush.msra.mxu0 0.0
        %311 = vmatpush.msra.mxu0 0.0
        %312 = vmatpush.msra.mxu0 0.0
        %313 = vmatpush.msra.mxu0 0.0
        %314 = vmatpush.msra.mxu0 0.0
        %315 = vmatpush.msra.mxu0 0.0
        %316 = vmatpush.msra.mxu0 0.0
        %317 = vmatpush.msra.mxu0 0.0
        %318 = vmatpush.msra.mxu0 %v300
        %319 = vmatpush.msra.mxu0 %v298
        %320 = vmatpush.msra.mxu0 %v296
        %321 = vmatpush.msra.mxu0 %v294
        %322 = vmatmul.f32.gmra.mxu0 %v304
        %v323 = vpop.f32.mrf.mxu0
        %v324 = vadd.f32 0.0, %v323
        %325 = vdwg.mxu0
        %326 = vmatpush.msra.mxu0 0.0
        %327 = vmatpush.msra.mxu0 0.0
        %328 = vmatpush.msra.mxu0 0.0
        %329 = vmatpush.msra.mxu0 0.0
        %330 = vmatpush.msra.mxu0 0.0
        %331 = vmatpush.msra.mxu0 0.0
        %332 = vmatpush.msra.mxu0 0.0
        %333 = vmatpush.msra.mxu0 0.0
        %334 = vmatpush.msra.mxu0 0.0
        %335 = vmatpush.msra.mxu0 0.0
        %336 = vmatpush.msra.mxu0 0.0
        %337 = vmatpush.msra.mxu0 0.0
        %338 = vmatpush.msra.mxu0 %v301
        %339 = vmatpush.msra.mxu0 %v299
        %340 = vmatpush.msra.mxu0 %v297
        %341 = vmatpush.msra.mxu0 %v295
        %342 = vmatmul.f32.gmra.mxu0 %v304
        %v343 = vpop.f32.mrf.mxu0
        %v344 = vadd.f32 0.0, %v343
        %345 = vdwg.mxu0
        %v346 = vrot.slane %v324, 4
        %v347 = vmax.f32 %v324, %v346
        %v348 = vrot.slane %v347, 2
        %v349 = vmax.f32 %v347, %v348
        %v350 = vrot.slane %v349, 1
        %v351 = vmax.f32 %v349, %v350
        %v352 = vrot.slane %v344, 4
        %v353 = vmax.f32 %v344, %v352
        %v354 = vrot.slane %v353, 2
        %v355 = vmax.f32 %v353, %v354
        %v356 = vrot.slane %v355, 1
        %v357 = vmax.f32 %v355, %v356
        %v358 = vsub.f32 %v324, %v351
        %v359 = vsub.f32 %v344, %v357
        %v360 = vmul.f32 %v358, 1.442695
        %v361 = vpow.pop %v360
        %v362 = vmul.f32 %v359, 1.442695
        %v363 = vpow.pop %v362
        %v364 = vrot.slane %v361, 4
        %v365 = vadd.f32 %v361, %v364
        %v366 = vrot.slane %v365, 2
        %v367 = vadd.f32 %v365, %v366
        %v368 = vrot.slane %v367, 1
        %v369 = vadd.f32 %v367, %v368
        %v370 = vrot.slane %v363, 4
        %v371 = vadd.f32 %v363, %v370
        %v372 = vrot.slane %v371, 2
        %v373 = vadd.f32 %v371, %v372
        %v374 = vrot.slane %v373, 1
        %v375 = vadd.f32 %v373, %v374
        %v376 = vrcp.pop %v369
        %v377 = vrcp.pop %v375
        %v378 = vmul.f32 %v361, %v376
        %v379 = vmul.f32 %v363, %v377
        %380 = vst [vmem:[%s276] sm:$0xff] %v378
        %381 = vst [vmem:[%s276 + $0x8] sm:$0xff] %v379
        %vm382 = vcmask 64512
        %v384 = vsel %vm382, %v290, 0
        %v387 = vsel %vm382, %v291, 0
        %v390 = vsel %vm382, %v292, 0
        %v393 = vsel %vm382, %v293, 0
        %395 = vmatpush.msra.mxu0 0.0
        %396 = vmatpush.msra.mxu0 0.0
        %397 = vmatpush.msra.mxu0 0.0
        %398 = vmatpush.msra.mxu0 0.0
        %399 = vmatpush.msra.mxu0 0.0
        %400 = vmatpush.msra.mxu0 0.0
        %401 = vmatpush.msra.mxu0 0.0
        %402 = vmatpush.msra.mxu0 0.0
        %403 = vmatpush.msra.mxu0 0.0
        %404 = vmatpush.msra.mxu0 0.0
        %405 = vmatpush.msra.mxu0 0.0
        %406 = vmatpush.msra.mxu0 0.0
        %407 = vmatpush.msra.mxu0 0.0
        %408 = vmatpush.msra.mxu0 0.0
        %409 = vmatpush.msra.mxu0 0.0
        %410 = vmatpush.msra.mxu0 %v378
        %411 = vmatmul.f32.gmra.mxu0 %v384
        %v412 = vpop.f32.mrf.mxu0
        %v413 = vadd.f32 0.0, %v412
        %414 = vmatmul.f32.gmra.mxu0 %v387
        %v415 = vpop.f32.mrf.mxu0
        %v416 = vadd.f32 0.0, %v415
        %417 = vmatmul.f32.gmra.mxu0 %v390
        %v418 = vpop.f32.mrf.mxu0
        %v419 = vadd.f32 0.0, %v418
        %420 = vmatmul.f32.gmra.mxu0 %v393
        %v421 = vpop.f32.mrf.mxu0
        %v422 = vadd.f32 0.0, %v421
        %423 = vdwg.mxu0
        %424 = vmatpush.msra.mxu0 0.0
        %425 = vmatpush.msra.mxu0 0.0
        %426 = vmatpush.msra.mxu0 0.0
        %427 = vmatpush.msra.mxu0 0.0
        %428 = vmatpush.msra.mxu0 0.0
        %429 = vmatpush.msra.mxu0 0.0
        %430 = vmatpush.msra.mxu0 0.0
        %431 = vmatpush.msra.mxu0 0.0
        %432 = vmatpush.msra.mxu0 0.0
        %433 = vmatpush.msra.mxu0 0.0
        %434 = vmatpush.msra.mxu0 0.0
        %435 = vmatpush.msra.mxu0 0.0
        %436 = vmatpush.msra.mxu0 0.0
        %437 = vmatpush.msra.mxu0 0.0
        %438 = vmatpush.msra.mxu0 0.0
        %439 = vmatpush.msra.mxu0 %v379
        %440 = vmatmul.f32.gmra.mxu0 %v384
        %v441 = vpop.f32.mrf.mxu0
        %v442 = vadd.f32 0.0, %v441
        %443 = vmatmul.f32.gmra.mxu0 %v387
        %v444 = vpop.f32.mrf.mxu0
        %v445 = vadd.f32 0.0, %v444
        %446 = vmatmul.f32.gmra.mxu0 %v390
        %v447 = vpop.f32.mrf.mxu0
        %v448 = vadd.f32 0.0, %v447
        %449 = vmatmul.f32.gmra.mxu0 %v393
        %v450 = vpop.f32.mrf.mxu0
        %v451 = vadd.f32 0.0, %v450
        %452 = vdwg.mxu0
        %453 = vst [vmem:[%s269] sm:$0xff] %v413
        %454 = vst [vmem:[%s269 + $0x8] sm:$0xff] %v442
        %455 = vst [vmem:[%s269 + $0x10] sm:$0xff] %v416
        %456 = vst [vmem:[%s269 + $0x18] sm:$0xff] %v445
        %457 = vst [vmem:[%s269 + $0x20] sm:$0xff] %v419
        %458 = vst [vmem:[%s269 + $0x28] sm:$0xff] %v448
        %459 = vst [vmem:[%s269 + $0x30] sm:$0xff] %v422
        %460 = vst [vmem:[%s269 + $0x38] sm:$0xff] %v451
        %s461 = sand.u32 %s127, 1
        %s462 = scalar_lea.sflag [#allocation4], %s461
        %s463 = sand.u32 %s127, 1
        %s464 = smul.addr %s463, 64
        %s465 = scalar_lea.vmem [#allocation5], %s464
        %s466 = sand.u32 %s155, 1
        %s467 = scalar_lea.sflag [#allocation7], %s466
        %s468 = sand.u32 %s155, 1
        %s469 = smul.addr %s468, 16
        %s470 = scalar_lea.vmem [#allocation6], %s469
        // Predicated region
        $region37: #{tpu_custom_call.1} parent=31 // pred_check
          %p471 = pneg %p137
        $region38: #{tpu_custom_call.1} parent=31 // pred_check_branch
          %473 = sbr.rel (%p471) target = $region40
        $region39: #{tpu_custom_call.1} parent=31 // pred_region
          %s474 = smul.u32 2, %s30
          %476 = vsyncadd %s462, 0
          %s477 = smul.addr %s29, 8
          %s478 = sadd.s32 %s474, %s477
          %s479 = smul.addr %s478, 8
          %s480 = scalar_lea.hbm %s3, %s479
          %s481 = sshll.u32 %s465, 4
          %s482 = int_to_ptr.vmem [resolvable:$true] %s481
          %s483 = sshll.u32 %s480, 4
          %s484 = int_to_ptr.hbm [resolvable:$true] %s483
          %489 = dma.vmem_to_hbm [thread:$0]  %s482, 1024, %s484, %s462, 256, 256, 16
        $region40: #{tpu_custom_call.1} parent=31 // pred_fallthru
          _
        // Predicated region
        $region41: #{tpu_custom_call.1} parent=31 // pred_check
          %p490 = pneg %p165
        $region42: #{tpu_custom_call.1} parent=31 // pred_check_branch
          %492 = sbr.rel (%p490) target = $region44
        $region43: #{tpu_custom_call.1} parent=31 // pred_region
          %s493 = smul.u32 2, %s30
          %495 = vsyncadd %s467, 0
          %s496 = smul.addr %s29, 2
          %s497 = sadd.s32 %s493, %s496
          %s498 = smul.addr %s497, 8
          %s499 = scalar_lea.hbm %s4, %s498
          %s501 = sshll.u32 %s470, 4
          %s502 = int_to_ptr.vmem [resolvable:$true] %s501
          %s503 = sshll.u32 %s499, 4
          %s504 = int_to_ptr.hbm [resolvable:$true] %s503
          %506 = dma.vmem_to_hbm [thread:$0]  %s502, 256, %s504, %s467
        $region44: #{tpu_custom_call.1} parent=31 // pred_fallthru
          _
      $region32: #{tpu_custom_call.1} parent=5 // pred_fallthru
        _
      %p507 = scmp.le.s32.totalorder 2, %s20
      // Predicated region
      $region45: #{tpu_custom_call.1} parent=5 // pred_check
        %p508 = pneg %p507
      $region46: #{tpu_custom_call.1} parent=5 // pred_check_branch
        %510 = sbr.rel (%p508) target = $region48
      $region47: #{tpu_custom_call.1} parent=5 // pred_region
        %s511 = ssub.s32 %s20, 2
        // Predicated region
        $region49: #{tpu_custom_call.1} parent=47 // pred_check
          %p512 = pneg %p143
        $region50: #{tpu_custom_call.1} parent=47 // pred_check_branch
          %514 = sbr.rel (%p512) target = $region52
        $region51: #{tpu_custom_call.1} parent=47 // pred_region
          %s515 = sand.u32 %s128, 1
          %s516 = scalar_lea.sflag [#allocation4], %s515
          %s517 = sand.u32 %s128, 1
          %s518 = smul.addr %s517, 64
          %s519 = scalar_lea.vmem [#allocation5], %s518
          %521 = dma.done %s516, 1024
        $region52: #{tpu_custom_call.1} parent=47 // pred_fallthru
          _
        // Predicated region
        $region53: #{tpu_custom_call.1} parent=47 // pred_check
          %p522 = pneg %p171
        $region54: #{tpu_custom_call.1} parent=47 // pred_check_branch
          %524 = sbr.rel (%p522) target = $region56
        $region55: #{tpu_custom_call.1} parent=47 // pred_region
          %s525 = sand.u32 %s156, 1
          %s526 = scalar_lea.sflag [#allocation7], %s525
          %s527 = sand.u32 %s156, 1
          %s528 = smul.addr %s527, 16
          %s529 = scalar_lea.vmem [#allocation6], %s528
          %531 = dma.done %s526, 256
        $region56: #{tpu_custom_call.1} parent=47 // pred_fallthru
          _
      $region48: #{tpu_custom_call.1} parent=5 // pred_fallthru
        _
    $region6: #{tpu_custom_call.1} parent=1 // loop_footer
      %s24 = sadd.s32 1, %s20
    $region7: #{tpu_custom_call.1} parent=1 // loop_footer_branch
      %19 = sbr.rel target = $region3
    $region8: #{tpu_custom_call.1} parent=1 // loop_exit
      _
    %532 = vsyncpa [#allocation3], 1
    %s533 = scalar_lea.sflag [#allocation3], 1
    %534 = vsyncpa %s533, 1
    %535 = vsyncpa [#allocation4], 1
    %s536 = scalar_lea.sflag [#allocation4], 1
    %537 = vsyncpa %s536, 1
    %538 = vsyncpa [#allocation7], 1
    %s539 = scalar_lea.sflag [#allocation7], 1
    %540 = vsyncpa %s539, 1

</llo_original>
